<compile_context>
chip_gen: v7x
topology: tpu7x:2x2x1
jax: 0.10.0
libtpu: 0.0.40
codegen_flags: <defaults>
</compile_context>

<pallas_src>
import jax
import jax.numpy as jnp
from jax import lax
from jax.experimental import pallas as pl
from jax.experimental.pallas import tpu as pltpu


_STATIC_UNROLL_GROUPS = 16  # fully unroll the framing loop below this many groups


# ----------------------------- Pallas kernel ------------------------------- #

def _make_spectrogram_kernel(n_points, n_fft, f_pad, t_frames, pad, tb, grp):
    """Fused centering + framing + windowed-DFT power-spectrogram kernel.

    Per grid step (tb batch elements, hop == 1):
      frames[n, b*T + t] = x_pad[b, n + t] - mean_b
      s                  = basis @ frames          (one stacked bf16 MXU matmul)
      out                = s[:F_pad]**2 + s[F_pad:]**2   (packed lane-dense)
    """
    inv_n = 1.0 / float(n_points)
    slab_w = t_frames + grp - 1
    n_groups = n_fft // grp

    def kernel(xpad_ref, basis_ref, o_ref, fr_ref):
        # xpad_ref : (tb, 1, npad)     f32   reflect-padded raw signal
        # basis_ref: (2*F_pad, n_fft)  bf16  window-folded stacked [cos; -sin] basis
        # o_ref    : (1, F_pad, tb*T)  f32   packed (lane-dense) power spectrogram
        # fr_ref   : (n_fft, tb*T)     bf16  frame-matrix scratch

        # per-batch-element means, broadcast over that element's T lanes (hoisted
        # out of the group loop; centering commutes with reflect padding)
        means = []
        for b in range(tb):
            sig = xpad_ref[b, :, pl.ds(pad, n_points)]                  # (1, N)
            means.append(jnp.full((1, t_frames), jnp.sum(sig) * inv_n, jnp.float32))
        mean_vec = jnp.concatenate(means, axis=1) if tb > 1 else means[0]  # (1, tb*T)

        def build_group(base):
            # Build `grp` consecutive frame rows with ONE store:
            # one slab load per batch element, `grp` static in-register shifts,
            # one (grp, tb*T) bf16 store (16-sublane aligned for the bf16 tile).
            cols = []
            for b in range(tb):
                slab = xpad_ref[b, :, pl.ds(base, slab_w)]              # (1, T+grp-1)
                rows = [slab[:, i:i + t_frames] for i in range(grp)]    # static shifts
                cols.append(jnp.concatenate(rows, axis=0))              # (grp, T)
            block = jnp.concatenate(cols, axis=1) if tb > 1 else cols[0]  # (grp, tb*T)
            block = (block - mean_vec).astype(jnp.bfloat16)
            fr_ref[pl.ds(base, grp), :] = block

        if n_groups <= _STATIC_UNROLL_GROUPS:
            for g in range(n_groups):                 # fully static (demo path)
                build_group(g * grp)
        else:
            # bounded code size at large n_fft (avoid 2048-row Python unrolls)
            def body(g, carry):
                build_group(pl.multiple_of(g * grp, grp))
                return carry
            lax.fori_loop(0, n_groups, body, 0)

        # single stacked bf16 MXU matmul, f32 accumulation
        s = jnp.dot(basis_ref[...], fr_ref[...],
                    preferred_element_type=jnp.float32)                 # (2*F_pad, tb*T)
        real = s[:f_pad]                                                # 8-aligned split
        imag = s[f_pad:]
        o_ref[0] = real * real + imag * imag                            # one full store

    return kernel


# ------------------------------- wrapper ----------------------------------- #

def linear_net_forward(x, lambd, fc_w, fc_b, hop_length=1):
    """Forward pass of LinearNet. Returns (logits, spectrograms)."""
    if hop_length != 1:
        # TODO(synk): lane-strided framing for hop_length > 1 not implemented.
        raise NotImplementedError("only hop_length == 1 is supported")

    x = x.astype(jnp.float32)
    B, N = x.shape
    n_fft = 2 * N
    f_bins = N + 1
    T = N // hop_length + 1
    pad = n_fft // 2
    npad = N + 2 * pad                                  # 3N
    f_pad = ((f_bins + 7) // 8) * 8                     # sublane-aligned split point
    n_classes = fc_b.shape[-1]

    # frame-row group size: 16 matches the bf16 packed sublane tile
    grp = 1
    for g in (16, 8, 4, 2):
        if n_fft % g == 0:
            grp = g
            break

    # ---- batch tile: target a 256-lane RHS, keep grid_b >= 2 when B >= 2
    #      (v7x has 2 TensorCores), stay inside a conservative VMEM budget ----
    def workset_bytes(tb):
        lanes = tb * T
        return (2 * tb * npad * 4                 # xpad blocks (double-buffered)
                + 2 * 2 * f_pad * n_fft * 2       # basis (double-buffered, bf16)
                + n_fft * lanes * 2               # frame scratch (bf16)
                + 2 * f_pad * lanes * 4)          # output blocks (double-buffered)

    tb_cap = min(B, max(1, pl.cdiv(256, T)))
    if B >= 2:
        tb_cap = min(tb_cap, max(1, B // 2))      # keep >= 2 grid steps for 2 TCs
    tb = 1
    for cand in range(1, tb_cap + 1):
        if B % cand == 0 and workset_bytes(cand) <= 40 * 1024 * 1024:
            tb = cand
    grid_b = B // tb

    # ---- host glue: reflect center-padding of the raw signal (centering is
    #      folded into the kernel; it commutes with reflect padding) ----
    x_pad = jnp.pad(x, ((0, 0), (pad, pad)), mode="reflect")[:, None, :]   # (B, 1, 3N)

    # ---- host glue: window-folded stacked DFT basis; cos half zero-padded to a
    #      multiple-of-8 row count; bf16 for full-rate MXU ----
    lam = jnp.maximum(jnp.abs(jnp.asarray(lambd, jnp.float32)), 1e-6)      # eps clamp
    ts = jnp.arange(n_fft, dtype=jnp.float32) - (n_fft // 2)
    window = jnp.exp(-0.5 * (ts / lam) ** 2)                               # (n_fft,)
    # TODO(synk): normalize_window option of SpectrogramLayer not applied (default False).
    k = jnp.arange(f_bins, dtype=jnp.float32)[:, None]
    n = jnp.arange(n_fft, dtype=jnp.float32)[None, :]
    ang = 2.0 * jnp.pi * k * n / float(n_fft)
    zrows = jnp.zeros((f_pad - f_bins, n_fft), jnp.float32)
    basis = jnp.concatenate(
        [jnp.cos(ang) * window, zrows, -jnp.sin(ang) * window, zrows], axis=0
    ).astype(jnp.bfloat16)                                                 # (2*F_pad, n_fft)

    vmem_limit = int(min(64 * 1024 * 1024,
                         max(32 * 1024 * 1024, 4 * workset_bytes(tb))))

    spec_packed = pl.pallas_call(
        _make_spectrogram_kernel(N, n_fft, f_pad, T, pad, tb, grp),
        out_shape=jax.ShapeDtypeStruct((grid_b, f_pad, tb * T), jnp.float32),
        grid=(grid_b,),
        in_specs=[
            pl.BlockSpec((tb, 1, npad), lambda i: (i, 0, 0)),
            pl.BlockSpec((2 * f_pad, n_fft), lambda i: (0, 0)),            # grid-invariant
        ],
        out_specs=pl.BlockSpec((1, f_pad, tb * T), lambda i: (i, 0, 0)),
        scratch_shapes=[pltpu.VMEM((n_fft, tb * T), jnp.bfloat16)],
        compiler_params=pltpu.CompilerParams(
            dimension_semantics=("parallel",),   # batch tiles across v7x's two TCs
            vmem_limit_bytes=vmem_limit,
        ),
    )(x_pad, basis)

    # ---- wrapper-side unpack of the packed lane-dense kernel layout ----
    spec = (spec_packed.reshape(grid_b, f_pad, tb, T)
            .transpose(0, 2, 1, 3)
            .reshape(B, f_pad, T)[:, :f_bins, :])                          # (B, F, T)
    s = spec[:, None, :, :]                                                # (B, 1, F, T)

    # ---- fc: tiny matmul -> plain jnp per review (pallas overhead dominates) ----
    logits = (spec.reshape(B, f_bins * T) @ fc_w.astype(jnp.float32).T
              + fc_b.astype(jnp.float32))
    return logits, s


# ------------------------- pure-JAX f32 reference -------------------------- #

def _reference_forward(x, lambd, fc_w, fc_b, hop_length=1):
    x = x.astype(jnp.float32)
    B, N = x.shape
    n_fft, f_bins, T, pad = 2 * N, N + 1, N // hop_length + 1, N
    xc = x - jnp.mean(x, axis=1, keepdims=True)
    xp = jnp.pad(xc, ((0, 0), (pad, pad)), mode="reflect")
    lam = jnp.maximum(jnp.abs(jnp.asarray(lambd, jnp.float32)), 1e-6)
    t = jnp.arange(n_fft, dtype=jnp.float32) - n_fft // 2
    win = jnp.exp(-0.5 * (t / lam) ** 2)
    k = jnp.arange(f_bins, dtype=jnp.float32)[:, None]
    n = jnp.arange(n_fft, dtype=jnp.float32)[None, :]
    ang = 2.0 * jnp.pi * k * n / float(n_fft)
    cosb, sinb = jnp.cos(ang) * win, -jnp.sin(ang) * win
    idx = jnp.arange(n_fft)[:, None] + hop_length * jnp.arange(T)[None, :]
    frames = xp[:, idx]                                                    # (B, n_fft, T)
    re = jnp.einsum("kn,bnt->bkt", cosb, frames, precision="highest")
    im = jnp.einsum("kn,bnt->bkt", sinb, frames, precision="highest")
    spec = re * re + im * im
    logits = spec.reshape(B, -1) @ fc_w.astype(jnp.float32).T + fc_b.astype(jnp.float32)
    return logits, spec[:, None, :, :]


# --------------------------------- main ------------------------------------ #

if __name__ == "__main__":
    key = jax.random.PRNGKey(0)
    k_x, k_w, k_b = jax.random.split(key, 3)

    # small shapes: batch=2, n_points=32, hop_length=1 -> spectrogram (33, 33)
    B, N, hop, n_classes = 2, 32, 1, 4
    f_bins, T = N + 1, N // hop + 1
    size = (f_bins, T)                        # size[0]*size[1] == fc in_features

    x = jax.random.normal(k_x, (B, N), dtype=jnp.float32)
    init_lambd = jnp.float32(5.0)                                   # SpectrogramLayer.lambd
    fc_w = 0.02 * jax.random.normal(k_w, (n_classes, size[0] * size[1]), jnp.float32)
    fc_b = 0.02 * jax.random.normal(k_b, (n_classes,), jnp.float32)

    logits, s = linear_net_forward(x, init_lambd, fc_w, fc_b, hop_length=hop)
    jax.block_until_ready((logits, s))

    assert logits.shape == (B, n_classes) and logits.dtype == jnp.float32
    assert s.shape == (B, 1, f_bins, T) and s.dtype == jnp.float32

    # correctness vs pure-JAX f32 reference (bf16 MXU feed -> loose tolerance)
    ref_logits, ref_s = _reference_forward(x, init_lambd, fc_w, fc_b, hop_length=hop)

    def rel_err(a, b):
        return float(jnp.linalg.norm((a - b).ravel()) /
                     (jnp.linalg.norm(b.ravel()) + 1e-30))

    assert rel_err(s, ref_s) < 0.1, f"spectrogram mismatch: {rel_err(s, ref_s)}"
    assert rel_err(logits, ref_logits) < 0.1, f"logits mismatch: {rel_err(logits, ref_logits)}"

    print("KERNEL_OK")
</pallas_src>

<mosaic_0001>
module attributes {stable_mosaic.version = 11 : i64} {
  func.func @kernel(%arg0: i32, %arg1: memref<1x1x96xf32, #tpu.memory_space<vmem>>, %arg2: memref<80x64xbf16, #tpu.memory_space<vmem>>, %arg3: memref<1x40x33xf32, #tpu.memory_space<vmem>>, %arg4: memref<64x33xbf16, #tpu.memory_space<vmem>>) attributes {dimension_semantics = [#tpu.dimension_semantics<parallel>], iteration_bounds = array<i64: 2>, scalar_prefetch = 0 : i64, scratch_operands = 1 : i64, tpu.core_type = #tpu.core_type<tc>, window_params = [{transform_indices = @transform_0, window_bounds = array<i64: 1, 1, 96>}, {pipeline_mode = #tpu.pipeline_mode<synchronous>, transform_indices = @transform_1, window_bounds = array<i64: 80, 64>}, {transform_indices = @transform_2, window_bounds = array<i64: 1, 40, 33>}]} {
    %c0 = arith.constant 0 : index
    %c0_0 = arith.constant 0 : index
    %c32 = arith.constant 32 : index
    %0 = vector.load %arg1[%c0, %c0_0, %c32] : memref<1x1x96xf32, #tpu.memory_space<vmem>>, vector<1x1x32xf32>
    %1 = vector.shape_cast %0 : vector<1x1x32xf32> to vector<1x32xf32>
    %2 = vector.shape_cast %1 : vector<1x32xf32> to vector<1x1x32xf32>
    %cst = arith.constant dense<0.000000e+00> : vector<1xf32>
    %3 = vector.multi_reduction <add>, %2, %cst [1, 2] : vector<1x1x32xf32> to vector<1xf32>
    %4 = vector.shape_cast %3 : vector<1xf32> to vector<1x1x1xf32>
    %5 = vector.extract %4[0, 0, 0] : f32 from vector<1x1x1xf32>
    %cst_1 = arith.constant 3.125000e-02 : f32
    %6 = arith.mulf %5, %cst_1 : f32
    %7 = vector.broadcast %6 : f32 to vector<1x33xf32>
    %c0_2 = arith.constant 0 : index
    %c0_3 = arith.constant 0 : index
    %c0_4 = arith.constant 0 : index
    %8 = vector.load %arg1[%c0_2, %c0_3, %c0_4] : memref<1x1x96xf32, #tpu.memory_space<vmem>>, vector<1x1x48xf32>
    %9 = vector.shape_cast %8 : vector<1x1x48xf32> to vector<1x48xf32>
    %10 = vector.extract_strided_slice %9 {offsets = [0, 0], sizes = [1, 33], strides = [1, 1]} : vector<1x48xf32> to vector<1x33xf32>
    %11 = vector.extract_strided_slice %9 {offsets = [0, 1], sizes = [1, 33], strides = [1, 1]} : vector<1x48xf32> to vector<1x33xf32>
    %12 = vector.extract_strided_slice %9 {offsets = [0, 2], sizes = [1, 33], strides = [1, 1]} : vector<1x48xf32> to vector<1x33xf32>
    %13 = vector.extract_strided_slice %9 {offsets = [0, 3], sizes = [1, 33], strides = [1, 1]} : vector<1x48xf32> to vector<1x33xf32>
    %14 = vector.extract_strided_slice %9 {offsets = [0, 4], sizes = [1, 33], strides = [1, 1]} : vector<1x48xf32> to vector<1x33xf32>
    %15 = vector.extract_strided_slice %9 {offsets = [0, 5], sizes = [1, 33], strides = [1, 1]} : vector<1x48xf32> to vector<1x33xf32>
    %16 = vector.extract_strided_slice %9 {offsets = [0, 6], sizes = [1, 33], strides = [1, 1]} : vector<1x48xf32> to vector<1x33xf32>
    %17 = vector.extract_strided_slice %9 {offsets = [0, 7], sizes = [1, 33], strides = [1, 1]} : vector<1x48xf32> to vector<1x33xf32>
    %18 = vector.extract_strided_slice %9 {offsets = [0, 8], sizes = [1, 33], strides = [1, 1]} : vector<1x48xf32> to vector<1x33xf32>
    %19 = vector.extract_strided_slice %9 {offsets = [0, 9], sizes = [1, 33], strides = [1, 1]} : vector<1x48xf32> to vector<1x33xf32>
    %20 = vector.extract_strided_slice %9 {offsets = [0, 10], sizes = [1, 33], strides = [1, 1]} : vector<1x48xf32> to vector<1x33xf32>
    %21 = vector.extract_strided_slice %9 {offsets = [0, 11], sizes = [1, 33], strides = [1, 1]} : vector<1x48xf32> to vector<1x33xf32>
    %22 = vector.extract_strided_slice %9 {offsets = [0, 12], sizes = [1, 33], strides = [1, 1]} : vector<1x48xf32> to vector<1x33xf32>
    %23 = vector.extract_strided_slice %9 {offsets = [0, 13], sizes = [1, 33], strides = [1, 1]} : vector<1x48xf32> to vector<1x33xf32>
    %24 = vector.extract_strided_slice %9 {offsets = [0, 14], sizes = [1, 33], strides = [1, 1]} : vector<1x48xf32> to vector<1x33xf32>
    %25 = vector.extract_strided_slice %9 {offsets = [0, 15], sizes = [1, 33], strides = [1, 1]} : vector<1x48xf32> to vector<1x33xf32>
    %26 = tpu.concatenate %10, %11, %12, %13, %14, %15, %16, %17, %18, %19, %20, %21, %22, %23, %24, %25 in 0 : vector<1x33xf32>, vector<1x33xf32>, vector<1x33xf32>, vector<1x33xf32>, vector<1x33xf32>, vector<1x33xf32>, vector<1x33xf32>, vector<1x33xf32>, vector<1x33xf32>, vector<1x33xf32>, vector<1x33xf32>, vector<1x33xf32>, vector<1x33xf32>, vector<1x33xf32>, vector<1x33xf32>, vector<1x33xf32> -> vector<16x33xf32>
    %27 = vector.broadcast %7 : vector<1x33xf32> to vector<16x33xf32>
    %28 = arith.subf %26, %27 : vector<16x33xf32>
    %29 = arith.truncf %28 : vector<16x33xf32> to vector<16x33xbf16>
    %c0_5 = arith.constant 0 : index
    %c0_6 = arith.constant 0 : index
    %30 = vector.load %arg4[%c0_5, %c0_6] : memref<64x33xbf16, #tpu.memory_space<vmem>>, vector<16x33xbf16>
    tpu.vector_store %arg4[%c0_5, %c0_6], %29 {strides = array<i32>} : memref<64x33xbf16, #tpu.memory_space<vmem>>, vector<16x33xbf16>,
    %c0_7 = arith.constant 0 : index
    %c0_8 = arith.constant 0 : index
    %c16 = arith.constant 16 : index
    %31 = vector.load %arg1[%c0_7, %c0_8, %c16] : memref<1x1x96xf32, #tpu.memory_space<vmem>>, vector<1x1x48xf32>
    %32 = vector.shape_cast %31 : vector<1x1x48xf32> to vector<1x48xf32>
    %33 = vector.extract_strided_slice %32 {offsets = [0, 0], sizes = [1, 33], strides = [1, 1]} : vector<1x48xf32> to vector<1x33xf32>
    %34 = vector.extract_strided_slice %32 {offsets = [0, 1], sizes = [1, 33], strides = [1, 1]} : vector<1x48xf32> to vector<1x33xf32>
    %35 = vector.extract_strided_slice %32 {offsets = [0, 2], sizes = [1, 33], strides = [1, 1]} : vector<1x48xf32> to vector<1x33xf32>
    %36 = vector.extract_strided_slice %32 {offsets = [0, 3], sizes = [1, 33], strides = [1, 1]} : vector<1x48xf32> to vector<1x33xf32>
    %37 = vector.extract_strided_slice %32 {offsets = [0, 4], sizes = [1, 33], strides = [1, 1]} : vector<1x48xf32> to vector<1x33xf32>
    %38 = vector.extract_strided_slice %32 {offsets = [0, 5], sizes = [1, 33], strides = [1, 1]} : vector<1x48xf32> to vector<1x33xf32>
    %39 = vector.extract_strided_slice %32 {offsets = [0, 6], sizes = [1, 33], strides = [1, 1]} : vector<1x48xf32> to vector<1x33xf32>
    %40 = vector.extract_strided_slice %32 {offsets = [0, 7], sizes = [1, 33], strides = [1, 1]} : vector<1x48xf32> to vector<1x33xf32>
    %41 = vector.extract_strided_slice %32 {offsets = [0, 8], sizes = [1, 33], strides = [1, 1]} : vector<1x48xf32> to vector<1x33xf32>
    %42 = vector.extract_strided_slice %32 {offsets = [0, 9], sizes = [1, 33], strides = [1, 1]} : vector<1x48xf32> to vector<1x33xf32>
    %43 = vector.extract_strided_slice %32 {offsets = [0, 10], sizes = [1, 33], strides = [1, 1]} : vector<1x48xf32> to vector<1x33xf32>
    %44 = vector.extract_strided_slice %32 {offsets = [0, 11], sizes = [1, 33], strides = [1, 1]} : vector<1x48xf32> to vector<1x33xf32>
    %45 = vector.extract_strided_slice %32 {offsets = [0, 12], sizes = [1, 33], strides = [1, 1]} : vector<1x48xf32> to vector<1x33xf32>
    %46 = vector.extract_strided_slice %32 {offsets = [0, 13], sizes = [1, 33], strides = [1, 1]} : vector<1x48xf32> to vector<1x33xf32>
    %47 = vector.extract_strided_slice %32 {offsets = [0, 14], sizes = [1, 33], strides = [1, 1]} : vector<1x48xf32> to vector<1x33xf32>
    %48 = vector.extract_strided_slice %32 {offsets = [0, 15], sizes = [1, 33], strides = [1, 1]} : vector<1x48xf32> to vector<1x33xf32>
    %49 = tpu.concatenate %33, %34, %35, %36, %37, %38, %39, %40, %41, %42, %43, %44, %45, %46, %47, %48 in 0 : vector<1x33xf32>, vector<1x33xf32>, vector<1x33xf32>, vector<1x33xf32>, vector<1x33xf32>, vector<1x33xf32>, vector<1x33xf32>, vector<1x33xf32>, vector<1x33xf32>, vector<1x33xf32>, vector<1x33xf32>, vector<1x33xf32>, vector<1x33xf32>, vector<1x33xf32>, vector<1x33xf32>, vector<1x33xf32> -> vector<16x33xf32>
    %50 = vector.broadcast %7 : vector<1x33xf32> to vector<16x33xf32>
    %51 = arith.subf %49, %50 : vector<16x33xf32>
    %52 = arith.truncf %51 : vector<16x33xf32> to vector<16x33xbf16>
    %c16_9 = arith.constant 16 : index
    %c0_10 = arith.constant 0 : index
    %53 = vector.load %arg4[%c16_9, %c0_10] : memref<64x33xbf16, #tpu.memory_space<vmem>>, vector<16x33xbf16>
    tpu.vector_store %arg4[%c16_9, %c0_10], %52 {strides = array<i32>} : memref<64x33xbf16, #tpu.memory_space<vmem>>, vector<16x33xbf16>,
    %c0_11 = arith.constant 0 : index
    %c0_12 = arith.constant 0 : index
    %c32_13 = arith.constant 32 : index
    %54 = vector.load %arg1[%c0_11, %c0_12, %c32_13] : memref<1x1x96xf32, #tpu.memory_space<vmem>>, vector<1x1x48xf32>
    %55 = vector.shape_cast %54 : vector<1x1x48xf32> to vector<1x48xf32>
    %56 = vector.extract_strided_slice %55 {offsets = [0, 0], sizes = [1, 33], strides = [1, 1]} : vector<1x48xf32> to vector<1x33xf32>
    %57 = vector.extract_strided_slice %55 {offsets = [0, 1], sizes = [1, 33], strides = [1, 1]} : vector<1x48xf32> to vector<1x33xf32>
    %58 = vector.extract_strided_slice %55 {offsets = [0, 2], sizes = [1, 33], strides = [1, 1]} : vector<1x48xf32> to vector<1x33xf32>
    %59 = vector.extract_strided_slice %55 {offsets = [0, 3], sizes = [1, 33], strides = [1, 1]} : vector<1x48xf32> to vector<1x33xf32>
    %60 = vector.extract_strided_slice %55 {offsets = [0, 4], sizes = [1, 33], strides = [1, 1]} : vector<1x48xf32> to vector<1x33xf32>
    %61 = vector.extract_strided_slice %55 {offsets = [0, 5], sizes = [1, 33], strides = [1, 1]} : vector<1x48xf32> to vector<1x33xf32>
    %62 = vector.extract_strided_slice %55 {offsets = [0, 6], sizes = [1, 33], strides = [1, 1]} : vector<1x48xf32> to vector<1x33xf32>
    %63 = vector.extract_strided_slice %55 {offsets = [0, 7], sizes = [1, 33], strides = [1, 1]} : vector<1x48xf32> to vector<1x33xf32>
    %64 = vector.extract_strided_slice %55 {offsets = [0, 8], sizes = [1, 33], strides = [1, 1]} : vector<1x48xf32> to vector<1x33xf32>
    %65 = vector.extract_strided_slice %55 {offsets = [0, 9], sizes = [1, 33], strides = [1, 1]} : vector<1x48xf32> to vector<1x33xf32>
    %66 = vector.extract_strided_slice %55 {offsets = [0, 10], sizes = [1, 33], strides = [1, 1]} : vector<1x48xf32> to vector<1x33xf32>
    %67 = vector.extract_strided_slice %55 {offsets = [0, 11], sizes = [1, 33], strides = [1, 1]} : vector<1x48xf32> to vector<1x33xf32>
    %68 = vector.extract_strided_slice %55 {offsets = [0, 12], sizes = [1, 33], strides = [1, 1]} : vector<1x48xf32> to vector<1x33xf32>
    %69 = vector.extract_strided_slice %55 {offsets = [0, 13], sizes = [1, 33], strides = [1, 1]} : vector<1x48xf32> to vector<1x33xf32>
    %70 = vector.extract_strided_slice %55 {offsets = [0, 14], sizes = [1, 33], strides = [1, 1]} : vector<1x48xf32> to vector<1x33xf32>
    %71 = vector.extract_strided_slice %55 {offsets = [0, 15], sizes = [1, 33], strides = [1, 1]} : vector<1x48xf32> to vector<1x33xf32>
    %72 = tpu.concatenate %56, %57, %58, %59, %60, %61, %62, %63, %64, %65, %66, %67, %68, %69, %70, %71 in 0 : vector<1x33xf32>, vector<1x33xf32>, vector<1x33xf32>, vector<1x33xf32>, vector<1x33xf32>, vector<1x33xf32>, vector<1x33xf32>, vector<1x33xf32>, vector<1x33xf32>, vector<1x33xf32>, vector<1x33xf32>, vector<1x33xf32>, vector<1x33xf32>, vector<1x33xf32>, vector<1x33xf32>, vector<1x33xf32> -> vector<16x33xf32>
    %73 = vector.broadcast %7 : vector<1x33xf32> to vector<16x33xf32>
    %74 = arith.subf %72, %73 : vector<16x33xf32>
    %75 = arith.truncf %74 : vector<16x33xf32> to vector<16x33xbf16>
    %c32_14 = arith.constant 32 : index
    %c0_15 = arith.constant 0 : index
    %76 = vector.load %arg4[%c32_14, %c0_15] : memref<64x33xbf16, #tpu.memory_space<vmem>>, vector<16x33xbf16>
    tpu.vector_store %arg4[%c32_14, %c0_15], %75 {strides = array<i32>} : memref<64x33xbf16, #tpu.memory_space<vmem>>, vector<16x33xbf16>,
    %c0_16 = arith.constant 0 : index
    %c0_17 = arith.constant 0 : index
    %c48 = arith.constant 48 : index
    %77 = vector.load %arg1[%c0_16, %c0_17, %c48] : memref<1x1x96xf32, #tpu.memory_space<vmem>>, vector<1x1x48xf32>
    %78 = vector.shape_cast %77 : vector<1x1x48xf32> to vector<1x48xf32>
    %79 = vector.extract_strided_slice %78 {offsets = [0, 0], sizes = [1, 33], strides = [1, 1]} : vector<1x48xf32> to vector<1x33xf32>
    %80 = vector.extract_strided_slice %78 {offsets = [0, 1], sizes = [1, 33], strides = [1, 1]} : vector<1x48xf32> to vector<1x33xf32>
    %81 = vector.extract_strided_slice %78 {offsets = [0, 2], sizes = [1, 33], strides = [1, 1]} : vector<1x48xf32> to vector<1x33xf32>
    %82 = vector.extract_strided_slice %78 {offsets = [0, 3], sizes = [1, 33], strides = [1, 1]} : vector<1x48xf32> to vector<1x33xf32>
    %83 = vector.extract_strided_slice %78 {offsets = [0, 4], sizes = [1, 33], strides = [1, 1]} : vector<1x48xf32> to vector<1x33xf32>
    %84 = vector.extract_strided_slice %78 {offsets = [0, 5], sizes = [1, 33], strides = [1, 1]} : vector<1x48xf32> to vector<1x33xf32>
    %85 = vector.extract_strided_slice %78 {offsets = [0, 6], sizes = [1, 33], strides = [1, 1]} : vector<1x48xf32> to vector<1x33xf32>
    %86 = vector.extract_strided_slice %78 {offsets = [0, 7], sizes = [1, 33], strides = [1, 1]} : vector<1x48xf32> to vector<1x33xf32>
    %87 = vector.extract_strided_slice %78 {offsets = [0, 8], sizes = [1, 33], strides = [1, 1]} : vector<1x48xf32> to vector<1x33xf32>
    %88 = vector.extract_strided_slice %78 {offsets = [0, 9], sizes = [1, 33], strides = [1, 1]} : vector<1x48xf32> to vector<1x33xf32>
    %89 = vector.extract_strided_slice %78 {offsets = [0, 10], sizes = [1, 33], strides = [1, 1]} : vector<1x48xf32> to vector<1x33xf32>
    %90 = vector.extract_strided_slice %78 {offsets = [0, 11], sizes = [1, 33], strides = [1, 1]} : vector<1x48xf32> to vector<1x33xf32>
    %91 = vector.extract_strided_slice %78 {offsets = [0, 12], sizes = [1, 33], strides = [1, 1]} : vector<1x48xf32> to vector<1x33xf32>
    %92 = vector.extract_strided_slice %78 {offsets = [0, 13], sizes = [1, 33], strides = [1, 1]} : vector<1x48xf32> to vector<1x33xf32>
    %93 = vector.extract_strided_slice %78 {offsets = [0, 14], sizes = [1, 33], strides = [1, 1]} : vector<1x48xf32> to vector<1x33xf32>
    %94 = vector.extract_strided_slice %78 {offsets = [0, 15], sizes = [1, 33], strides = [1, 1]} : vector<1x48xf32> to vector<1x33xf32>
    %95 = tpu.concatenate %79, %80, %81, %82, %83, %84, %85, %86, %87, %88, %89, %90, %91, %92, %93, %94 in 0 : vector<1x33xf32>, vector<1x33xf32>, vector<1x33xf32>, vector<1x33xf32>, vector<1x33xf32>, vector<1x33xf32>, vector<1x33xf32>, vector<1x33xf32>, vector<1x33xf32>, vector<1x33xf32>, vector<1x33xf32>, vector<1x33xf32>, vector<1x33xf32>, vector<1x33xf32>, vector<1x33xf32>, vector<1x33xf32> -> vector<16x33xf32>
    %96 = vector.broadcast %7 : vector<1x33xf32> to vector<16x33xf32>
    %97 = arith.subf %95, %96 : vector<16x33xf32>
    %98 = arith.truncf %97 : vector<16x33xf32> to vector<16x33xbf16>
    %c48_18 = arith.constant 48 : index
    %c0_19 = arith.constant 0 : index
    %99 = vector.load %arg4[%c48_18, %c0_19] : memref<64x33xbf16, #tpu.memory_space<vmem>>, vector<16x33xbf16>
    tpu.vector_store %arg4[%c48_18, %c0_19], %98 {strides = array<i32>} : memref<64x33xbf16, #tpu.memory_space<vmem>>, vector<16x33xbf16>,
    %c0_20 = arith.constant 0 : index
    %c0_21 = arith.constant 0 : index
    %100 = vector.load %arg2[%c0_20, %c0_21] : memref<80x64xbf16, #tpu.memory_space<vmem>>, vector<80x64xbf16>
    %c0_22 = arith.constant 0 : index
    %c0_23 = arith.constant 0 : index
    %101 = vector.load %arg4[%c0_22, %c0_23] : memref<64x33xbf16, #tpu.memory_space<vmem>>, vector<64x33xbf16>
    %cst_24 = arith.constant dense<0.000000e+00> : vector<80x33xf32>
    %102 = tpu.matmul %100, %101, %cst_24 {dimension_numbers = #tpu.dot_dimension_numbers<[1], [0], [0], [1], [0, 0, 1, 1], [], []>} : vector<80x64xbf16>, vector<64x33xbf16>, vector<80x33xf32> -> vector<80x33xf32>
    %103 = vector.extract_strided_slice %102 {offsets = [0, 0], sizes = [40, 33], strides = [1, 1]} : vector<80x33xf32> to vector<40x33xf32>
    %104 = vector.extract_strided_slice %102 {offsets = [40, 0], sizes = [40, 33], strides = [1, 1]} : vector<80x33xf32> to vector<40x33xf32>
    %105 = arith.mulf %103, %103 : vector<40x33xf32>
    %106 = arith.mulf %104, %104 : vector<40x33xf32>
    %107 = arith.addf %105, %106 : vector<40x33xf32>
    %c0_25 = arith.constant 0 : index
    %c0_26 = arith.constant 0 : index
    %c0_27 = arith.constant 0 : index
    %108 = vector.load %arg3[%c0_25, %c0_26, %c0_27] : memref<1x40x33xf32, #tpu.memory_space<vmem>>, vector<1x40x33xf32>
    %109 = vector.shape_cast %108 : vector<1x40x33xf32> to vector<40x33xf32>
    %110 = vector.shape_cast %107 : vector<40x33xf32> to vector<1x40x33xf32>
    tpu.vector_store %arg3[%c0_25, %c0_26, %c0_27], %110 {strides = array<i32>} : memref<1x40x33xf32, #tpu.memory_space<vmem>>, vector<1x40x33xf32>,
    return
  }
  func.func @transform_0(%arg0: i32) -> (i32, i32, i32) {
    %c0_i32 = arith.constant 0 : i32
    %c0_i32_0 = arith.constant 0 : i32
    %c0_i32_1 = arith.constant 0 : i32
    return %arg0, %c0_i32, %c0_i32_0 : i32, i32, i32
  }
  func.func @transform_1(%arg0: i32) -> (i32, i32) {
    %c0_i32 = arith.constant 0 : i32
    %c0_i32_0 = arith.constant 0 : i32
    %c0_i32_1 = arith.constant 0 : i32
    return %c0_i32, %c0_i32_0 : i32, i32
  }
  func.func @transform_2(%arg0: i32) -> (i32, i32, i32) {
    %c0_i32 = arith.constant 0 : i32
    %c0_i32_0 = arith.constant 0 : i32
    %c0_i32_1 = arith.constant 0 : i32
    return %arg0, %c0_i32, %c0_i32_0 : i32, i32, i32
  }
}

</mosaic_0001>

<llo_original>
// kernel: tpu_custom_call.1
$region0: #{tpu_custom_call.1}
  #allocation0 [shape = 'u32[]', space=smem, size = 0x4, offset = 0x4, fixed_abs, tag = 'smem constant byte address 0x4 - core index']
  #allocation1 [shape = 'u32[144,128]{1,0:T(1,128)}', space=vmem, size = 0x12000, scoped, tag = 'internal scratch']
  #allocation2 [shape = 'bf16[64,33]{1,0:T(16,128)(2,1)}', space=vmem, size = 0x4000, scoped, tag = 'scratch operand']
  %s0 = inlined_call_operand.vmem [shape: f32[2,1,96], index: 0, kind: input, shape index: {}]
  %s1 = inlined_call_operand.vmem [shape: bf16[80,64], index: 1, kind: input, shape index: {}]
  %s2 = inlined_call_operand.vmem [shape: f32[2,40,33], index: 2, kind: output, shape index: {}]
  %s3 = sld [smem:[#allocation0]]
  $region41: #{tpu_custom_call.1} parent=0
    _
  %s5 = ssub.s32 1, %s3
  %s6 = scalar_select 0, %s5, %s3
  loop: start=0, step=1, limit=4
  $region2: #{tpu_custom_call.1} parent=0 // loop_pre_header
    _
  $region3: #{tpu_custom_call.1} parent=0 // loop_header
    %s8 = sphi 0, %s12
    %p9 = scmp.ge.s32.totalorder %s8, 4
    %s18 = sphi 0, %s20
    %s21 = sphi 0, %s18
    %s22 = sphi 0, %s21
    %s38 = sphi 0, %s22
    %s42 = sphi 0, %s42
    %s44 = sphi 0, %s42
    %s45 = sphi 0, %s44
    %s59 = sphi 0, %s45
    %s65 = sphi 0, %s67
    %s68 = sphi 0, %s65
    %s69 = sphi 0, %s68
    %s85 = sphi 0, %s69
  $region4: #{tpu_custom_call.1} parent=0 // loop_header_branch
    %11 = sbr.rel (%p9) target = $region8
  $region5: #{tpu_custom_call.1} parent=0 // loop_body
    %s13 = ssub.s32 %s8, 1
    %s14 = ssub.s32 %s8, 2
    %s15 = sadd.s32 %s8, 1
    %s16 = ssub.s32 %s8, %s15
    %p17 = scmp.eq.s32.totalorder %s16, 0
    %s19 = sadd.s32 %s18, 1
    %s20 = scalar_select %p17, %s18, %s19
    %p23 = pneg %p17
    %p24 = scmp.eq.s32.totalorder %s8, 1
    %p25 = por %p23, %p24
    %p26 = scmp.ne.s32.totalorder %s18, %s21
    %p27 = scmp.eq.s32.totalorder %s8, 0
    %p28 = por %p26, %p27
    %p29 = scmp.ne.s32.totalorder %s18, %s21
    %p30 = scmp.eq.s32.totalorder %s13, 1
    %p31 = por %p29, %p30
    %p32 = scmp.ne.s32.totalorder %s21, %s22
    %p33 = scmp.eq.s32.totalorder %s13, 0
    %p34 = por %p32, %p33
    %p35 = scmp.ne.s32.totalorder %s21, %s22
    %p36 = scmp.eq.s32.totalorder %s14, 1
    %p37 = por %p35, %p36
    %p39 = scmp.ne.s32.totalorder %s22, %s38
    %p40 = scmp.eq.s32.totalorder %s14, 0
    %p41 = por %p39, %p40
    %s43 = sadd.s32 %s42, 1
    %p46 = scmp.eq.s32.totalorder %s8, 1
    %p47 = scmp.ne.s32.totalorder %s42, %s44
    %p48 = scmp.eq.s32.totalorder %s8, 0
    %p49 = por %p47, %p48
    %p50 = scmp.ne.s32.totalorder %s42, %s44
    %p51 = scmp.eq.s32.totalorder %s13, 1
    %p52 = por %p50, %p51
    %p53 = scmp.ne.s32.totalorder %s44, %s45
    %p54 = scmp.eq.s32.totalorder %s13, 0
    %p55 = por %p53, %p54
    %p56 = scmp.ne.s32.totalorder %s44, %s45
    %p57 = scmp.eq.s32.totalorder %s14, 1
    %p58 = por %p56, %p57
    %p60 = scmp.ne.s32.totalorder %s45, %s59
    %p61 = scmp.eq.s32.totalorder %s14, 0
    %p62 = por %p60, %p61
    %s63 = ssub.s32 %s8, %s15
    %p64 = scmp.eq.s32.totalorder %s63, 0
    %s66 = sadd.s32 %s65, 1
    %s67 = scalar_select %p64, %s65, %s66
    %p70 = pneg %p64
    %p71 = scmp.eq.s32.totalorder %s8, 1
    %p72 = por %p70, %p71
    %p73 = scmp.ne.s32.totalorder %s65, %s68
    %p74 = scmp.eq.s32.totalorder %s8, 0
    %p75 = por %p73, %p74
    %p76 = scmp.ne.s32.totalorder %s65, %s68
    %p77 = scmp.eq.s32.totalorder %s13, 1
    %p78 = por %p76, %p77
    %p79 = scmp.ne.s32.totalorder %s68, %s69
    %p80 = scmp.eq.s32.totalorder %s13, 0
    %p81 = por %p79, %p80
    %p82 = scmp.ne.s32.totalorder %s68, %s69
    %p83 = scmp.eq.s32.totalorder %s14, 1
    %p84 = por %p82, %p83
    %p86 = scmp.ne.s32.totalorder %s69, %s85
    %p87 = scmp.eq.s32.totalorder %s14, 0
    %p88 = por %p86, %p87
    %p89 = scmp.le.s32.totalorder 1, %s8
    %p90 = scmp.lt.s32.totalorder %s8, 3
    %p91 = pnand %p89, %p90
    %p92 = pneg %p91
    // Predicated region
    $region9: #{tpu_custom_call.1} parent=5 // pred_check
      _
    $region10: #{tpu_custom_call.1} parent=5 // pred_check_branch
      %94 = sbr.rel (%p91) target = $region12
    $region11: #{tpu_custom_call.1} parent=5 // pred_region
      %s95 = ssub.s32 %s8, 1
      // Predicated region
      $region13: #{tpu_custom_call.1} parent=11 // pred_check
        %p96 = pneg %p55
      $region14: #{tpu_custom_call.1} parent=11 // pred_check_branch
        %98 = sbr.rel (%p96) target = $region16
      $region15: #{tpu_custom_call.1} parent=11 // pred_region
        _
      $region16: #{tpu_custom_call.1} parent=11 // pred_fallthru
        _
    $region12: #{tpu_custom_call.1} parent=5 // pred_fallthru
      _
    %p99 = scmp.lt.s32.totalorder %s8, 2
    // Predicated region
    $region17: #{tpu_custom_call.1} parent=5 // pred_check
      %p100 = pneg %p99
    $region18: #{tpu_custom_call.1} parent=5 // pred_check_branch
      %102 = sbr.rel (%p100) target = $region20
    $region19: #{tpu_custom_call.1} parent=5 // pred_region
      // Predicated region
      $region21: #{tpu_custom_call.1} parent=19 // pred_check
        %p103 = pneg %p28
      $region22: #{tpu_custom_call.1} parent=19 // pred_check_branch
        %105 = sbr.rel (%p103) target = $region24
      $region23: #{tpu_custom_call.1} parent=19 // pred_region
        %p106 = scmp.lt.s32.totalorder %s8, 1
        %s107 = scalar_select %p106, %s8, 1
        %s108 = scalar_lea.vmem %s0, %s107
      $region24: #{tpu_custom_call.1} parent=19 // pred_fallthru
        _
    $region20: #{tpu_custom_call.1} parent=5 // pred_fallthru
      _
    %p109 = scmp.le.s32.totalorder 1, %s8
    %p110 = scmp.lt.s32.totalorder %s8, 3
    %p111 = pnand %p109, %p110
    %p112 = pneg %p111
    // Predicated region
    $region25: #{tpu_custom_call.1} parent=5 // pred_check
      _
    $region26: #{tpu_custom_call.1} parent=5 // pred_check_branch
      %114 = sbr.rel (%p111) target = $region28
    $region27: #{tpu_custom_call.1} parent=5 // pred_region
      %s115 = ssub.s32 %s8, 1
      %p116 = scmp.lt.s32.totalorder %s13, 1
      %s117 = scalar_select %p116, %s13, 1
      %s118 = scalar_lea.vmem %s0, %s117
      %p119 = pneg %p34
      %p120 = pneg %p31
      %p121 = pneg %p55
      %p122 = pneg %p52
      %p123 = pneg %p81
      %p124 = pneg %p78
      %p125 = scmp.lt.s32.totalorder %s13, 1
      %s126 = scalar_select %p125, %s13, 1
      %s127 = smul.addr %s126, 5
      %s128 = smul.addr %s127, 8
      %s129 = scalar_lea.vmem %s2, %s128
      %p130 = scmp.lt.s32.totalorder %s13, 1
      %s131 = scalar_select %p130, %s13, 1
      %s132 = scalar_lea.vmem %s0, %s131
      %p133 = scmp.lt.s32.totalorder %s13, 1
      %s134 = scalar_select %p133, %s13, 1
      %s135 = smul.addr %s134, 5
      %s136 = smul.addr %s135, 8
      %s137 = scalar_lea.vmem %s2, %s136
      %v139 = vld [vmem:[%s132] sm:$0x1]
      %v141 = vlaneseq
      %v142 = vshrl.u32 %v141, 7
      %v143 = vsub.s32 0, %v142
      %v144 = vrot.slane %v139, %v143
      %145 = vrot.lane.b32.xlu0 %v144, 96
      %v146 = vpop.permute.xlu0 %145
      %vm148 = vcmask 253952
      %v149 = vsel %vm148, %v146, 0.0
      %150 = vadd.xlane.f32.xlu0 %v149
      %v151 = vpop.xlane.xlu0 %150
      %v152 = vrot.slane %v151, 4
      %v153 = vadd.f32 %v151, %v152
      %v154 = vrot.slane %v153, 2
      %v155 = vadd.f32 %v153, %v154
      %v156 = vrot.slane %v155, 1
      %v157 = vadd.f32 %v155, %v156
      %s158 = vtos %v157
      %s159 = smul.f32 %s158, 0.03125
      %160 = vrot.lane.b32.xlu0 %v144, 127
      %v161 = vpop.permute.xlu0 %160
      %163 = vrot.lane.b32.xlu0 %v144, 126
      %v164 = vpop.permute.xlu0 %163
      %166 = vrot.lane.b32.xlu0 %v144, 125
      %v167 = vpop.permute.xlu0 %166
      %169 = vrot.lane.b32.xlu0 %v144, 124
      %v170 = vpop.permute.xlu0 %169
      %172 = vrot.lane.b32.xlu0 %v144, 123
      %v173 = vpop.permute.xlu0 %172
      %175 = vrot.lane.b32.xlu0 %v144, 122
      %v176 = vpop.permute.xlu0 %175
      %178 = vrot.lane.b32.xlu0 %v144, 121
      %v179 = vpop.permute.xlu0 %178
      %181 = vrot.lane.b32.xlu0 %v144, 120
      %v182 = vpop.permute.xlu0 %181
      %184 = vrot.lane.b32.xlu0 %v144, 119
      %v185 = vpop.permute.xlu0 %184
      %187 = vrot.lane.b32.xlu0 %v144, 118
      %v188 = vpop.permute.xlu0 %187
      %190 = vrot.lane.b32.xlu0 %v144, 117
      %v191 = vpop.permute.xlu0 %190
      %193 = vrot.lane.b32.xlu0 %v144, 116
      %v194 = vpop.permute.xlu0 %193
      %196 = vrot.lane.b32.xlu0 %v144, 115
      %v197 = vpop.permute.xlu0 %196
      %199 = vrot.lane.b32.xlu0 %v144, 114
      %v200 = vpop.permute.xlu0 %199
      %202 = vrot.lane.b32.xlu0 %v144, 113
      %v203 = vpop.permute.xlu0 %202
      %vm205 = vcmask 1040384
      %v206 = vsel %vm205, %v139, %v161
      %vm207 = vcmask 1041408
      %v208 = vsel %vm207, %v206, %v164
      %vm209 = vcmask 1042432
      %v210 = vsel %vm209, %v208, %v167
      %vm211 = vcmask 1043456
      %v212 = vsel %vm211, %v210, %v170
      %vm213 = vcmask 1044480
      %v214 = vsel %vm213, %v212, %v173
      %vm215 = vcmask 1045504
      %v216 = vsel %vm215, %v214, %v176
      %vm217 = vcmask 1046528
      %v218 = vsel %vm217, %v216, %v179
      %v219 = vsel %vm205, %v182, %v185
      %v220 = vsel %vm207, %v219, %v188
      %v221 = vsel %vm209, %v220, %v191
      %v222 = vsel %vm211, %v221, %v194
      %v223 = vsel %vm213, %v222, %v197
      %v224 = vsel %vm215, %v223, %v200
      %v225 = vsel %vm217, %v224, %v203
      %v226 = vstv %s159
      %v227 = vsub.f32 %v218, %v226
      %v228 = vsub.f32 %v225, %v226
      %v229 = vpack.c.bf16 %v228, %v227
      %vm230 = vcmask 269312
      %231 = vst.msk [vmem:[#allocation2] sm:$0xff] %vm230, %v229
      %v232 = vld [vmem:[%s132] sm:$0x1]
      %v234 = vlaneseq
      %v235 = vshrl.u32 %v234, 7
      %v236 = vsub.s32 0, %v235
      %v237 = vrot.slane %v232, %v236
      %238 = vrot.lane.b32.xlu0 %v237, 127
      %v239 = vpop.permute.xlu0 %238
      %241 = vrot.lane.b32.xlu0 %v237, 126
      %v242 = vpop.permute.xlu0 %241
      %244 = vrot.lane.b32.xlu0 %v237, 125
      %v245 = vpop.permute.xlu0 %244
      %247 = vrot.lane.b32.xlu0 %v237, 124
      %v248 = vpop.permute.xlu0 %247
      %250 = vrot.lane.b32.xlu0 %v237, 123
      %v251 = vpop.permute.xlu0 %250
      %253 = vrot.lane.b32.xlu0 %v237, 122
      %v254 = vpop.permute.xlu0 %253
      %256 = vrot.lane.b32.xlu0 %v237, 121
      %v257 = vpop.permute.xlu0 %256
      %259 = vrot.lane.b32.xlu0 %v237, 120
      %v260 = vpop.permute.xlu0 %259
      %262 = vrot.lane.b32.xlu0 %v237, 119
      %v263 = vpop.permute.xlu0 %262
      %265 = vrot.lane.b32.xlu0 %v237, 118
      %v266 = vpop.permute.xlu0 %265
      %268 = vrot.lane.b32.xlu0 %v237, 117
      %v269 = vpop.permute.xlu0 %268
      %271 = vrot.lane.b32.xlu0 %v237, 116
      %v272 = vpop.permute.xlu0 %271
      %274 = vrot.lane.b32.xlu0 %v237, 115
      %v275 = vpop.permute.xlu0 %274
      %277 = vrot.lane.b32.xlu0 %v237, 114
      %v278 = vpop.permute.xlu0 %277
      %280 = vrot.lane.b32.xlu0 %v237, 113
      %v281 = vpop.permute.xlu0 %280
      %v283 = vsel %vm205, %v232, %v239
      %v284 = vsel %vm207, %v283, %v242
      %v285 = vsel %vm209, %v284, %v245
      %v286 = vsel %vm211, %v285, %v248
      %v287 = vsel %vm213, %v286, %v251
      %v288 = vsel %vm215, %v287, %v254
      %v289 = vsel %vm217, %v288, %v257
      %v290 = vsel %vm205, %v260, %v263
      %v291 = vsel %vm207, %v290, %v266
      %v292 = vsel %vm209, %v291, %v269
      %v293 = vsel %vm211, %v292, %v272
      %v294 = vsel %vm213, %v293, %v275
      %v295 = vsel %vm215, %v294, %v278
      %v296 = vsel %vm217, %v295, %v281
      %v297 = vsub.f32 %v289, %v226
      %v298 = vsub.f32 %v296, %v226
      %v299 = vpack.c.bf16 %v298, %v297
      %301 = vrot.lane.b32.xlu0 %v299, 112
      %v302 = vpop.permute.xlu0 %301
      %304 = vst.msk [vmem:[#allocation2 + $0x8] sm:$0xff] %vm230, %v302
      %v305 = vld [vmem:[%s132] sm:$0x1]
      %v307 = vlaneseq
      %v308 = vshrl.u32 %v307, 7
      %v309 = vsub.s32 0, %v308
      %v310 = vrot.slane %v305, %v309
      %311 = vrot.lane.b32.xlu0 %v310, 127
      %v312 = vpop.permute.xlu0 %311
      %314 = vrot.lane.b32.xlu0 %v310, 126
      %v315 = vpop.permute.xlu0 %314
      %317 = vrot.lane.b32.xlu0 %v310, 125
      %v318 = vpop.permute.xlu0 %317
      %320 = vrot.lane.b32.xlu0 %v310, 124
      %v321 = vpop.permute.xlu0 %320
      %323 = vrot.lane.b32.xlu0 %v310, 123
      %v324 = vpop.permute.xlu0 %323
      %326 = vrot.lane.b32.xlu0 %v310, 122
      %v327 = vpop.permute.xlu0 %326
      %329 = vrot.lane.b32.xlu0 %v310, 121
      %v330 = vpop.permute.xlu0 %329
      %332 = vrot.lane.b32.xlu0 %v310, 120
      %v333 = vpop.permute.xlu0 %332
      %335 = vrot.lane.b32.xlu0 %v310, 119
      %v336 = vpop.permute.xlu0 %335
      %338 = vrot.lane.b32.xlu0 %v310, 118
      %v339 = vpop.permute.xlu0 %338
      %341 = vrot.lane.b32.xlu0 %v310, 117
      %v342 = vpop.permute.xlu0 %341
      %344 = vrot.lane.b32.xlu0 %v310, 116
      %v345 = vpop.permute.xlu0 %344
      %347 = vrot.lane.b32.xlu0 %v310, 115
      %v348 = vpop.permute.xlu0 %347
      %350 = vrot.lane.b32.xlu0 %v310, 114
      %v351 = vpop.permute.xlu0 %350
      %353 = vrot.lane.b32.xlu0 %v310, 113
      %v354 = vpop.permute.xlu0 %353
      %v356 = vsel %vm205, %v305, %v312
      %v357 = vsel %vm207, %v356, %v315
      %v358 = vsel %vm209, %v357, %v318
      %v359 = vsel %vm211, %v358, %v321
      %v360 = vsel %vm213, %v359, %v324
      %v361 = vsel %vm215, %v360, %v327
      %v362 = vsel %vm217, %v361, %v330
      %v363 = vsel %vm205, %v333, %v336
      %v364 = vsel %vm207, %v363, %v339
      %v365 = vsel %vm209, %v364, %v342
      %v366 = vsel %vm211, %v365, %v345
      %v367 = vsel %vm213, %v366, %v348
      %v368 = vsel %vm215, %v367, %v351
      %v369 = vsel %vm217, %v368, %v354
      %v370 = vsub.f32 %v362, %v226
      %v371 = vsub.f32 %v369, %v226
      %v372 = vpack.c.bf16 %v371, %v370
      %374 = vrot.lane.b32.xlu0 %v372, 96
      %v375 = vpop.permute.xlu0 %374
      %377 = vst.msk [vmem:[#allocation2 + $0x10] sm:$0xff] %vm230, %v375
      %v378 = vld [vmem:[%s132] sm:$0x1]
      %v380 = vlaneseq
      %v381 = vshrl.u32 %v380, 7
      %v382 = vsub.s32 0, %v381
      %v383 = vrot.slane %v378, %v382
      %384 = vrot.lane.b32.xlu0 %v383, 127
      %v385 = vpop.permute.xlu0 %384
      %387 = vrot.lane.b32.xlu0 %v383, 126
      %v388 = vpop.permute.xlu0 %387
      %390 = vrot.lane.b32.xlu0 %v383, 125
      %v391 = vpop.permute.xlu0 %390
      %393 = vrot.lane.b32.xlu0 %v383, 124
      %v394 = vpop.permute.xlu0 %393
      %396 = vrot.lane.b32.xlu0 %v383, 123
      %v397 = vpop.permute.xlu0 %396
      %399 = vrot.lane.b32.xlu0 %v383, 122
      %v400 = vpop.permute.xlu0 %399
      %402 = vrot.lane.b32.xlu0 %v383, 121
      %v403 = vpop.permute.xlu0 %402
      %405 = vrot.lane.b32.xlu0 %v383, 120
      %v406 = vpop.permute.xlu0 %405
      %408 = vrot.lane.b32.xlu0 %v383, 119
      %v409 = vpop.permute.xlu0 %408
      %411 = vrot.lane.b32.xlu0 %v383, 118
      %v412 = vpop.permute.xlu0 %411
      %414 = vrot.lane.b32.xlu0 %v383, 117
      %v415 = vpop.permute.xlu0 %414
      %417 = vrot.lane.b32.xlu0 %v383, 116
      %v418 = vpop.permute.xlu0 %417
      %420 = vrot.lane.b32.xlu0 %v383, 115
      %v421 = vpop.permute.xlu0 %420
      %423 = vrot.lane.b32.xlu0 %v383, 114
      %v424 = vpop.permute.xlu0 %423
      %426 = vrot.lane.b32.xlu0 %v383, 113
      %v427 = vpop.permute.xlu0 %426
      %v429 = vsel %vm205, %v378, %v385
      %v430 = vsel %vm207, %v429, %v388
      %v431 = vsel %vm209, %v430, %v391
      %v432 = vsel %vm211, %v431, %v394
      %v433 = vsel %vm213, %v432, %v397
      %v434 = vsel %vm215, %v433, %v400
      %v435 = vsel %vm217, %v434, %v403
      %v436 = vsel %vm205, %v406, %v409
      %v437 = vsel %vm207, %v436, %v412
      %v438 = vsel %vm209, %v437, %v415
      %v439 = vsel %vm211, %v438, %v418
      %v440 = vsel %vm213, %v439, %v421
      %v441 = vsel %vm215, %v440, %v424
      %v442 = vsel %vm217, %v441, %v427
      %v443 = vsub.f32 %v435, %v226
      %v444 = vsub.f32 %v442, %v226
      %v445 = vpack.c.bf16 %v444, %v443
      %447 = vrot.lane.b32.xlu0 %v445, 80
      %v448 = vpop.permute.xlu0 %447
      %450 = vst.msk [vmem:[#allocation2 + $0x18] sm:$0xff] %vm230, %v448
      %v451 = vld [vmem:[%s1] sm:$0xf]
      %v452 = vld [vmem:[%s1 + $0x4] sm:$0xf]
      %v453 = vld [vmem:[%s1 + $0x8] sm:$0xf]
      %v454 = vld [vmem:[%s1 + $0xc] sm:$0xf]
      %v455 = vld [vmem:[%s1 + $0x10] sm:$0xf]
      %v456 = vld [vmem:[%s1 + $0x14] sm:$0xf]
      %v457 = vld [vmem:[%s1 + $0x18] sm:$0xf]
      %v458 = vld [vmem:[%s1 + $0x1c] sm:$0xf]
      %v459 = vld [vmem:[%s1 + $0x20] sm:$0xf]
      %v460 = vld [vmem:[%s1 + $0x24] sm:$0xf]
      %v461 = vld [vmem:[#allocation2] sm:$0xff]
      %v462 = vld [vmem:[#allocation2 + $0x8] sm:$0xff]
      %v463 = vld [vmem:[#allocation2 + $0x10] sm:$0xff]
      %v464 = vld [vmem:[#allocation2 + $0x18] sm:$0xff]
      %v475 = vunpack.c.l.b16 %v451
      %v476 = vunpack.c.l.b16 %v452
      %v477 = vunpack.c.l.b16 %v453
      %v478 = vunpack.c.l.b16 %v454
      %v479 = vunpack.c.l.b16 %v455
      %v480 = vunpack.c.l.b16 %v456
      %v481 = vunpack.c.l.b16 %v457
      %v482 = vunpack.c.l.b16 %v458
      %v483 = vunpack.c.l.b16 %v459
      %v484 = vunpack.c.l.b16 %v460
      %v485 = vpack.c.b16 %v476, %v475
      %v486 = vpack.c.b16 %v478, %v477
      %v487 = vpack.c.b16 %v480, %v479
      %v488 = vpack.c.b16 %v482, %v481
      %v489 = vpack.c.b16 %v484, %v483
      %vm490 = vcmask 523264
      %v492 = vsel %vm490, %v485, 0
      %v495 = vsel %vm490, %v486, 0
      %v498 = vsel %vm490, %v487, 0
      %v501 = vsel %vm490, %v488, 0
      %v504 = vsel %vm490, %v489, 0
      %506 = vmatprep.subr.bf16.mxu0 0
      %507 = vmatpush1.bf16.msra.mxu0 %v461
      %508 = vmatprep.subr.bf16.mxu0 0
      %509 = vmatpush1.bf16.msra.mxu0 %v462
      %510 = vmatprep.subr.bf16.mxu0 0
      %511 = vmatpush1.bf16.msra.mxu0 %v463
      %512 = vmatprep.subr.bf16.mxu0 0
      %513 = vmatpush1.bf16.msra.mxu0 %v464
      %514 = vmatprep.subr.bf16.mxu0 0
      %515 = vmatpush1.bf16.msra.mxu0 0
      %516 = vmatprep.subr.bf16.mxu0 0
      %517 = vmatpush1.bf16.msra.mxu0 0
      %518 = vmatprep.subr.bf16.mxu0 0
      %519 = vmatpush1.bf16.msra.mxu0 0
      %520 = vmatprep.subr.bf16.mxu0 0
      %521 = vmatpush1.bf16.msra.mxu0 0
      %522 = vmatprep.subr.bf16.mxu0 0
      %523 = vmatpush1.bf16.msra.mxu0 0
      %524 = vmatprep.subr.bf16.mxu0 0
      %525 = vmatpush1.bf16.msra.mxu0 0
      %526 = vmatprep.subr.bf16.mxu0 0
      %527 = vmatpush1.bf16.msra.mxu0 0
      %528 = vmatprep.subr.bf16.mxu0 0
      %529 = vmatpush1.bf16.msra.mxu0 0
      %530 = vmatprep.subr.bf16.mxu0 0
      %531 = vmatpush1.bf16.msra.mxu0 0
      %532 = vmatprep.subr.bf16.mxu0 0
      %533 = vmatpush1.bf16.msra.mxu0 0
      %534 = vmatprep.subr.bf16.mxu0 0
      %535 = vmatpush1.bf16.msra.mxu0 0
      %536 = vmatprep.subr.bf16.mxu0 0
      %537 = vmatpush1.bf16.msra.mxu0 0
      %538 = vmatprep.mubr.bf16.mxu0 0
      %539 = vmatmul.mubr.bf16.gmra.mrb[0].mxu0 %v492
      %v540 = vpop.f32.mrb[0].mxu0
      %v541 = vadd.f32 0.0, %v540
      %v542 = vpop.f32.mrb[0].mxu0
      %v543 = vpop.f32.mrb[0].mxu0
      %v544 = vadd.f32 0.0, %v543
      %v545 = vpop.f32.mrb[0].mxu0
      %546 = vmatprep.mubr.bf16.mxu0 0
      %547 = vmatmul.mubr.bf16.gmra.mrb[0].mxu0 %v495
      %v548 = vpop.f32.mrb[0].mxu0
      %v549 = vadd.f32 0.0, %v548
      %v550 = vpop.f32.mrb[0].mxu0
      %v551 = vpop.f32.mrb[0].mxu0
      %v552 = vadd.f32 0.0, %v551
      %v553 = vpop.f32.mrb[0].mxu0
      %554 = vmatprep.mubr.bf16.mxu0 0
      %555 = vmatmul.mubr.bf16.gmra.mrb[0].mxu0 %v498
      %v556 = vpop.f32.mrb[0].mxu0
      %v557 = vadd.f32 0.0, %v556
      %v558 = vpop.f32.mrb[0].mxu0
      %v559 = vpop.f32.mrb[0].mxu0
      %v560 = vadd.f32 0.0, %v559
      %v561 = vpop.f32.mrb[0].mxu0
      %562 = vmatprep.mubr.bf16.mxu0 0
      %563 = vmatmul.mubr.bf16.gmra.mrb[0].mxu0 %v501
      %v564 = vpop.f32.mrb[0].mxu0
      %v565 = vadd.f32 0.0, %v564
      %v566 = vpop.f32.mrb[0].mxu0
      %v567 = vpop.f32.mrb[0].mxu0
      %v568 = vadd.f32 0.0, %v567
      %v569 = vpop.f32.mrb[0].mxu0
      %570 = vmatprep.mubr.bf16.mxu0 0
      %571 = vmatmul.mubr.bf16.gmra.mrb[0].mxu0 %v504
      %v572 = vpop.f32.mrb[0].mxu0
      %v573 = vadd.f32 0.0, %v572
      %v574 = vpop.f32.mrb[0].mxu0
      %v575 = vpop.f32.mrb[0].mxu0
      %v576 = vadd.f32 0.0, %v575
      %v577 = vpop.f32.mrb[0].mxu0
      %578 = vdwg.mxu0
      %v579 = vmul.f32 %v541, %v541
      %v580 = vmul.f32 %v544, %v544
      %v581 = vmul.f32 %v549, %v549
      %v582 = vmul.f32 %v552, %v552
      %v583 = vmul.f32 %v557, %v557
      %v584 = vmul.f32 %v560, %v560
      %v585 = vmul.f32 %v565, %v565
      %v586 = vmul.f32 %v568, %v568
      %v587 = vmul.f32 %v573, %v573
      %v588 = vmul.f32 %v576, %v576
      %v589 = vadd.f32 %v579, %v584
      %v590 = vadd.f32 %v580, %v585
      %v591 = vadd.f32 %v581, %v586
      %v592 = vadd.f32 %v582, %v587
      %v593 = vadd.f32 %v583, %v588
      %594 = vst.msk [vmem:[%s137] sm:$0xff] %vm230, %v589
      %595 = vst.msk [vmem:[%s137 + $0x8] sm:$0xff] %vm230, %v590
      %596 = vst.msk [vmem:[%s137 + $0x10] sm:$0xff] %vm230, %v591
      %597 = vst.msk [vmem:[%s137 + $0x18] sm:$0xff] %vm230, %v592
      %598 = vst.msk [vmem:[%s137 + $0x20] sm:$0xff] %vm230, %v593
      %p599 = scmp.lt.s32.totalorder %s13, 1
      %s600 = scalar_select %p599, %s13, 1
      %s601 = smul.addr %s600, 5
      %s602 = smul.addr %s601, 8
      %s603 = scalar_lea.vmem %s2, %s602
      // Predicated region
      $region29: #{tpu_custom_call.1} parent=27 // pred_check
        %p604 = pneg %p78
      $region30: #{tpu_custom_call.1} parent=27 // pred_check_branch
        %606 = sbr.rel (%p604) target = $region32
      $region31: #{tpu_custom_call.1} parent=27 // pred_region
        _
      $region32: #{tpu_custom_call.1} parent=27 // pred_fallthru
        _
    $region28: #{tpu_custom_call.1} parent=5 // pred_fallthru
      _
    %p607 = scmp.le.s32.totalorder 2, %s8
    // Predicated region
    $region33: #{tpu_custom_call.1} parent=5 // pred_check
      %p608 = pneg %p607
    $region34: #{tpu_custom_call.1} parent=5 // pred_check_branch
      %610 = sbr.rel (%p608) target = $region36
    $region35: #{tpu_custom_call.1} parent=5 // pred_region
      %s611 = ssub.s32 %s8, 2
      // Predicated region
      $region37: #{tpu_custom_call.1} parent=35 // pred_check
        %p612 = pneg %p84
      $region38: #{tpu_custom_call.1} parent=35 // pred_check_branch
        %614 = sbr.rel (%p612) target = $region40
      $region39: #{tpu_custom_call.1} parent=35 // pred_region
        %p615 = scmp.lt.s32.totalorder %s14, 1
        %s616 = scalar_select %p615, %s14, 1
        %s617 = smul.addr %s616, 5
        %s618 = smul.addr %s617, 8
        %s619 = scalar_lea.vmem %s2, %s618
      $region40: #{tpu_custom_call.1} parent=35 // pred_fallthru
        _
    $region36: #{tpu_custom_call.1} parent=5 // pred_fallthru
      _
  $region6: #{tpu_custom_call.1} parent=0 // loop_footer
    %s12 = sadd.s32 1, %s8
  $region7: #{tpu_custom_call.1} parent=0 // loop_footer_branch
    %7 = sbr.rel target = $region3
  $region8: #{tpu_custom_call.1} parent=0 // loop_exit
    _

</llo_original>
